<compile_context>
chip_gen: v7x
topology: tpu7x:2x2x1
jax: 0.10.0
libtpu: 0.0.40
codegen_flags: <defaults>
</compile_context>

<pallas_src>
import functools

import jax
import jax.numpy as jnp
from jax import lax
from jax.experimental import pallas as pl
from jax.experimental.pallas import tpu as pltpu


_LANE = 128
_VMEM = pl.BlockSpec(memory_space=pltpu.MemorySpace.VMEM)
_VMEM_LIMIT_CACHE = None


def _round_up(x, m):
    return ((x + m - 1) // m) * m


def _vmem_limit_bytes():
    """Generation-aware VMEM limit: 75% of physical VMEM, capped at 100 MiB."""
    global _VMEM_LIMIT_CACHE
    if _VMEM_LIMIT_CACHE is None:
        cap = 64 << 20                       # safe default (v7x per-core physical VMEM)
        try:
            cap = int(pltpu.get_tpu_info().vmem_capacity_bytes)
        except Exception:
            pass
        _VMEM_LIMIT_CACHE = int(max(32 << 20, min(cap * 3 // 4, 100 << 20)))
    return _VMEM_LIMIT_CACHE


# ----------------------------------------------------------------------------
# Pallas kernels
# ----------------------------------------------------------------------------
def matmul_bias_kernel(x_ref, w_ref, b_ref, o_ref):
    """o = x @ w + b for one row-tile.

    x_ref: [TM, I]   bf16 row-tile of the (time-major, flattened) layer input
    w_ref: [I, N]    bf16 fused gate weights (all gates, both directions) — resident
    b_ref: [1, N]    f32  input biases (+ folded r/z hidden biases)
    o_ref: [TM, N]   bf16 precomputed input projections gi for this row-tile
    """
    acc = jnp.dot(x_ref[...], w_ref[...], preferred_element_type=jnp.float32)
    o_ref[...] = (acc + b_ref[...]).astype(o_ref.dtype)


def gru_recurrence_kernel(gi_ref, wh_ref, bh_ref, y_ref, hT_ref, *, num_dirs):
    """Sequential GRU recurrence; fwd and bwd chains interleaved in one program.

    gi_ref: [S, B, D*3Hp] bf16  precomputed input projections (+ folded biases)
    wh_ref: [D*Hp, D*3Hp] bf16  block-diagonal fused recurrent weights
    bh_ref: [1, D*3Hp]    f32   [0 | 0 | b_hn] per direction (n-gate hidden bias only)
    y_ref : [S, B, D*Hp]  bf16  per-step outputs = next layer input (fwd | bwd lanes)
    hT_ref: [D, B, Hp]    f32   final hidden state per direction
    """
    S, B, _ = gi_ref.shape
    D = num_dirs
    H = hT_ref.shape[2]

    # Loop-invariant loads / broadcasts hoisted out of the recurrence.
    wh = wh_ref[...]                                          # [D*Hp, D*3Hp] bf16
    bh_b = jnp.broadcast_to(bh_ref[...], (B, D * 3 * H))      # [B, D*3Hp] f32

    def step(t, h_cat):
        # One full-width matmul drives the gates of BOTH directions (block-diag Wh).
        gh = jnp.dot(h_cat.astype(jnp.bfloat16), wh,
                     preferred_element_type=jnp.float32) + bh_b      # [B, D*3Hp]
        new_h = []
        for d in range(D):                                    # static: D <= 2
            # forward chain consumes time t; backward chain consumes time S-1-t
            t_d = t if d == 0 else S - 1 - t
            gi_d = gi_ref[t_d, :, d * 3 * H:(d + 1) * 3 * H].astype(jnp.float32)
            gh_d = gh[:, d * 3 * H:(d + 1) * 3 * H]
            h_d = h_cat[:, d * H:(d + 1) * H]
            r = jax.nn.sigmoid(gi_d[:, :H] + gh_d[:, :H])
            z = jax.nn.sigmoid(gi_d[:, H:2 * H] + gh_d[:, H:2 * H])
            n = jnp.tanh(gi_d[:, 2 * H:] + r * gh_d[:, 2 * H:])
            h_d_new = (1.0 - z) * n + z * h_d
            y_ref[t_d, :, d * H:(d + 1) * H] = h_d_new.astype(y_ref.dtype)
            new_h.append(h_d_new)
        return new_h[0] if D == 1 else jnp.concatenate(new_h, axis=-1)

    h0 = jnp.zeros((B, D * H), jnp.float32)
    hT = lax.fori_loop(0, S, step, h0, unroll=2)
    for d in range(D):
        hT_ref[d] = hT[:, d * H:(d + 1) * H]


def gru_head_kernel(h_ref, w_ref, b_ref, o_ref):
    """Fused cat(hidden[-2], hidden[-1]) + dropout(eval=identity) + Linear.

    h_ref: [D, B, Hp] f32, w_ref: [D, Hp, Op] f32, b_ref: [1, Op] f32, o_ref: [B, Op].
    The concat is realized as a sum of per-direction matmuls (no HBM concat pass).
    """
    acc = jnp.dot(h_ref[0], w_ref[0], preferred_element_type=jnp.float32)
    for i in range(1, h_ref.shape[0]):                        # static: D <= 2
        acc = acc + jnp.dot(h_ref[i], w_ref[i], preferred_element_type=jnp.float32)
    o_ref[...] = acc + b_ref[...]


# ----------------------------------------------------------------------------
# pallas_call wrappers
# ----------------------------------------------------------------------------
def run_input_projection(x2d, wi2d, bi2d):
    """Row-tiled (S*B) x (I -> N) projection; fused weight resident across the grid."""
    SB, I = x2d.shape
    N = wi2d.shape[1]
    TM = SB if SB <= 512 else 512                              # SB is a multiple of 8
    grid = (pl.cdiv(SB, TM),)
    return pl.pallas_call(
        matmul_bias_kernel,
        grid=grid,
        out_shape=jax.ShapeDtypeStruct((SB, N), jnp.bfloat16),
        in_specs=[
            pl.BlockSpec((TM, I), lambda i: (i, 0)),
            pl.BlockSpec((I, N), lambda i: (0, 0)),            # resident fused weight
            pl.BlockSpec((1, N), lambda i: (0, 0)),
        ],
        out_specs=pl.BlockSpec((TM, N), lambda i: (i, 0)),
        compiler_params=pltpu.CompilerParams(
            dimension_semantics=("parallel",),
            vmem_limit_bytes=_vmem_limit_bytes()),
    )(x2d, wi2d, bi2d)


def run_gru_recurrence(gi3d, wh_bd, bh, num_dirs):
    S, Bp, N = gi3d.shape
    Hp = N // (3 * num_dirs)
    kernel = functools.partial(gru_recurrence_kernel, num_dirs=num_dirs)
    y, hT = pl.pallas_call(
        kernel,
        out_shape=(jax.ShapeDtypeStruct((S, Bp, num_dirs * Hp), jnp.bfloat16),
                   jax.ShapeDtypeStruct((num_dirs, Bp, Hp), jnp.float32)),
        in_specs=[_VMEM, _VMEM, _VMEM],
        out_specs=(_VMEM, _VMEM),
        compiler_params=pltpu.CompilerParams(
            vmem_limit_bytes=_vmem_limit_bytes()),
    )(gi3d, wh_bd, bh)
    return y, hT


def run_head(hT, w_head, b_head):
    Bp = hT.shape[1]
    Op = w_head.shape[2]
    return pl.pallas_call(
        gru_head_kernel,
        out_shape=jax.ShapeDtypeStruct((Bp, Op), jnp.float32),
        in_specs=[_VMEM, _VMEM, _VMEM],
        out_specs=_VMEM,
        compiler_params=pltpu.CompilerParams(
            vmem_limit_bytes=_vmem_limit_bytes()),
    )(hT, w_head, b_head)


# ----------------------------------------------------------------------------
# Parameter init (deterministic, PyTorch-style uniform(-1/sqrt(H), 1/sqrt(H)))
# ----------------------------------------------------------------------------
def init_gru_direction_params(key, input_size, hidden_size):
    k = 1.0 / (hidden_size ** 0.5)
    ks = jax.random.split(key, 12)
    u = lambda kk, shp: jax.random.uniform(kk, shp, jnp.float32, -k, k)
    wir = u(ks[0], (input_size, hidden_size))
    wiz = u(ks[1], (input_size, hidden_size))
    win = u(ks[2], (input_size, hidden_size))
    whr = u(ks[3], (hidden_size, hidden_size))
    whz = u(ks[4], (hidden_size, hidden_size))
    whn = u(ks[5], (hidden_size, hidden_size))
    b_ir = u(ks[6], (1, hidden_size)); b_iz = u(ks[7], (1, hidden_size))
    b_in = u(ks[8], (1, hidden_size)); b_hr = u(ks[9], (1, hidden_size))
    b_hz = u(ks[10], (1, hidden_size)); b_hn = u(ks[11], (1, hidden_size))
    # r/z gates: input+hidden biases always appear summed; n gate keeps them split.
    return (wir, wiz, win, whr, whz, whn, b_ir + b_hr, b_iz + b_hz, b_in, b_hn)


def init_params(key, embedding_dim, hidden_dim, output_dim, n_layers, bidirectional):
    num_dirs = 2 if bidirectional else 1
    gru_layers = []
    for layer in range(n_layers):
        in_size = embedding_dim if layer == 0 else hidden_dim * num_dirs
        key, kf, kb = jax.random.split(key, 3)
        lp = {"fwd": init_gru_direction_params(kf, in_size, hidden_dim)}
        if bidirectional:
            lp["bwd"] = init_gru_direction_params(kb, in_size, hidden_dim)
        gru_layers.append(lp)
    fan_in = hidden_dim * num_dirs
    k = 1.0 / (fan_in ** 0.5)
    key, kw, kb = jax.random.split(key, 3)
    out_w_t = jax.random.uniform(kw, (fan_in, output_dim), jnp.float32, -k, k)
    out_b = jax.random.uniform(kb, (1, output_dim), jnp.float32, -k, k)
    return gru_layers, out_w_t, out_b


# ----------------------------------------------------------------------------
# Fuse + zero-pad parameters into the lane-dense, bf16 layout the kernels expect.
# Zero padding keeps the math exact: padded hidden lanes stay identically 0.
# ----------------------------------------------------------------------------
def _pad_cols(w, new_cols):
    return jnp.pad(w, ((0, 0), (0, new_cols - w.shape[1])))


def _pad_rows_segmented(w, seg_real, seg_pad):
    """Split rows of `w` into segments of sizes seg_real, zero-pad each segment to the
    matching seg_pad size (maps real input features onto the padded lane layout)."""
    blocks, off = [], 0
    for r, p in zip(seg_real, seg_pad):
        blocks.append(jnp.pad(w[off:off + r], ((0, p - r), (0, 0))))
        off += r
    return blocks[0] if len(blocks) == 1 else jnp.concatenate(blocks, axis=0)


def prepare_layer_kernel_params(layer_params, seg_real, seg_pad, Hp, num_dirs):
    wi_cols, bi_cols, bh_cols, wh_blocks = [], [], [], []
    for di, dname in enumerate(("fwd", "bwd")[:num_dirs]):
        wir, wiz, win, whr, whz, whn, br, bz, b_in, b_hn = layer_params[dname]
        H = wir.shape[1]
        pc = lambda w: _pad_cols(w, Hp)
        wi_f = jnp.concatenate([pc(wir), pc(wiz), pc(win)], axis=1)       # [I_real, 3Hp]
        wi_f = _pad_rows_segmented(wi_f, seg_real, seg_pad)               # [I_pad, 3Hp]
        wh_f = jnp.concatenate([pc(whr), pc(whz), pc(whn)], axis=1)       # [H, 3Hp]
        wh_f = jnp.pad(wh_f, ((0, Hp - H), (0, 0)))                       # [Hp, 3Hp]
        bi_f = jnp.concatenate([pc(br), pc(bz), pc(b_in)], axis=1)        # [1, 3Hp]
        bh_f = jnp.concatenate([jnp.zeros((1, 2 * Hp), jnp.float32), pc(b_hn)], axis=1)
        wi_cols.append(wi_f); bi_cols.append(bi_f); bh_cols.append(bh_f)
        # block-diagonal placement: direction d owns rows [d*Hp:(d+1)*Hp] and
        # columns [d*3Hp:(d+1)*3Hp] of the fused recurrent weight.
        row = [jnp.zeros((Hp, 3 * Hp), jnp.float32)] * num_dirs
        row[di] = wh_f
        wh_blocks.append(jnp.concatenate(row, axis=1))                    # [Hp, D*3Hp]
    wi2d = jnp.concatenate(wi_cols, axis=1).astype(jnp.bfloat16)          # [I_pad, D*3Hp]
    bi2d = jnp.concatenate(bi_cols, axis=1)                               # [1, D*3Hp] f32
    wh_bd = jnp.concatenate(wh_blocks, axis=0).astype(jnp.bfloat16)       # [D*Hp, D*3Hp]
    bh = jnp.concatenate(bh_cols, axis=1)                                 # [1, D*3Hp] f32
    return wi2d, bi2d, wh_bd, bh


def prepare_head_kernel_params(out_w_t, out_b, H, Hp, Op, num_dirs):
    O = out_w_t.shape[1]
    ws = []
    for d in range(num_dirs):
        wd = out_w_t[d * H:(d + 1) * H]                                   # [H, O]
        ws.append(jnp.pad(wd, ((0, Hp - H), (0, Op - O))))
    w_head = jnp.stack(ws, axis=0)                                        # [D, Hp, Op]
    b_head = jnp.pad(out_b, ((0, 0), (0, Op - O)))                        # [1, Op]
    return w_head, b_head


def prepare_kernel_params(gru_layers, out_w_t, out_b, embedding_dim, hidden_dim,
                          output_dim, bidirectional):
    num_dirs = 2 if bidirectional else 1
    H = hidden_dim
    Hp = _round_up(H, _LANE)
    Op = _round_up(output_dim, _LANE)
    layers = []
    for li, lp in enumerate(gru_layers):
        if li == 0:
            seg_real, seg_pad = [embedding_dim], [embedding_dim]          # embedded input unpadded
        else:
            seg_real, seg_pad = [H] * num_dirs, [Hp] * num_dirs           # padded fwd|bwd layout
        layers.append(prepare_layer_kernel_params(lp, seg_real, seg_pad, Hp, num_dirs))
    head = prepare_head_kernel_params(out_w_t, out_b, H, Hp, Op, num_dirs)
    return {"layers": layers, "head": head, "num_dirs": num_dirs}


# ----------------------------------------------------------------------------
# Forward pass (mirrors BERTGRUSentiment.forward, given BERT output `embedded`)
# ----------------------------------------------------------------------------
def bert_gru_sentiment_forward(embedded, kernel_params, output_dim):
    B, S, _ = embedded.shape
    num_dirs = kernel_params["num_dirs"]
    Bp = _round_up(B, 8)                                       # sublane-full batch tiles
    emb = jnp.pad(embedded, ((0, Bp - B), (0, 0), (0, 0)))
    # Single time-major transpose of the (bf16) BERT output; later layers are already
    # time-major.  TODO(synk): fold this transpose into the layer-0 projection kernel.
    x = jnp.transpose(emb, (1, 0, 2)).astype(jnp.bfloat16)     # [S, Bp, E]
    hT = None
    for (wi2d, bi2d, wh_bd, bh) in kernel_params["layers"]:
        I = x.shape[-1]
        # Row-tiled MXU matmul: all gates, both directions, biases folded in (bf16 gi out).
        gi2d = run_input_projection(x.reshape(S * Bp, I), wi2d, bi2d)
        gi3d = gi2d.reshape(S, Bp, gi2d.shape[-1])             # contiguous reshape
        # Sequential recurrence; fwd/bwd chains interleaved, one fused matmul per step.
        x, hT = run_gru_recurrence(gi3d, wh_bd, bh, num_dirs)
    w_head, b_head = kernel_params["head"]
    out_p = run_head(hT, w_head, b_head)                       # fused concat + dropout(id) + linear
    return out_p[:B, :output_dim]


# ----------------------------------------------------------------------------
# Pure-JAX f32 reference (PyTorch GRU semantics, unfused/unpadded params)
# ----------------------------------------------------------------------------
def gru_dir_ref(x_tmajor, h0, p):
    wir, wiz, win, whr, whz, whn, br, bz, b_in, b_hn = p
    ys = []
    h = h0
    for t in range(x_tmajor.shape[0]):
        x_t = x_tmajor[t]
        r = jax.nn.sigmoid(x_t @ wir + h @ whr + br)
        z = jax.nn.sigmoid(x_t @ wiz + h @ whz + bz)
        n = jnp.tanh(x_t @ win + b_in + r * (h @ whn + b_hn))
        h = (1.0 - z) * n + z * h
        ys.append(h)
    return jnp.stack(ys, 0), h


def forward_ref(embedded, gru_layers, out_w_t, out_b, bidirectional):
    B = embedded.shape[0]
    x = jnp.transpose(embedded, (1, 0, 2))
    finals = []
    for lp in gru_layers:
        H = lp["fwd"][0].shape[1]
        h0 = jnp.zeros((B, H), jnp.float32)
        y_f, h_f = gru_dir_ref(x, h0, lp["fwd"])
        finals.append(h_f)
        if bidirectional:
            y_b_rev, h_b = gru_dir_ref(x[::-1], h0, lp["bwd"])
            finals.append(h_b)
            x = jnp.concatenate([y_f, y_b_rev[::-1]], axis=-1)
        else:
            x = y_f
    hidden = (jnp.concatenate([finals[-2], finals[-1]], axis=1)
              if bidirectional else finals[-1])
    return hidden @ out_w_t + out_b


# ----------------------------------------------------------------------------
if __name__ == "__main__":
    # Small stand-in config (bert-base has E=768; we use E=32 for the demo).
    B, S = 2, 8
    EMBEDDING_DIM = 32
    HIDDEN_DIM = 32
    OUTPUT_DIM = 4          # AG News: 4 classes
    N_LAYERS = 2
    BIDIRECTIONAL = True

    key = jax.random.PRNGKey(0)
    k_emb, k_par = jax.random.split(key)

    # `embedded` plays the role of the frozen BERT output bert(**text)[0].
    embedded = jax.random.normal(k_emb, (B, S, EMBEDDING_DIM), jnp.float32)

    gru_layers, out_w_t, out_b = init_params(
        k_par, EMBEDDING_DIM, HIDDEN_DIM, OUTPUT_DIM, N_LAYERS, BIDIRECTIONAL)
    kparams = prepare_kernel_params(
        gru_layers, out_w_t, out_b, EMBEDDING_DIM, HIDDEN_DIM, OUTPUT_DIM, BIDIRECTIONAL)

    out = bert_gru_sentiment_forward(embedded, kparams, OUTPUT_DIM)
    out = jax.block_until_ready(out)

    ref = jax.block_until_ready(
        forward_ref(embedded, gru_layers, out_w_t, out_b, BIDIRECTIONAL))

    assert out.shape == (B, OUTPUT_DIM), out.shape
    # bf16 matmul operands (f32 accumulation / gate math) vs. pure-f32 reference.
    assert jnp.allclose(out, ref, atol=5e-2, rtol=5e-2), (out, ref)
    print("KERNEL_OK")
</pallas_src>

<mosaic_0001>
module attributes {stable_mosaic.version = 11 : i64} {
  func.func @matmul_bias_kernel(%arg0: i32, %arg1: memref<64x32xbf16, #tpu.memory_space<vmem>>, %arg2: memref<32x768xbf16, #tpu.memory_space<vmem>>, %arg3: memref<1x768xf32, #tpu.memory_space<vmem>>, %arg4: memref<64x768xbf16, #tpu.memory_space<vmem>>) attributes {dimension_semantics = [#tpu.dimension_semantics<parallel>], iteration_bounds = array<i64: 1>, scalar_prefetch = 0 : i64, scratch_operands = 0 : i64, tpu.core_type = #tpu.core_type<tc>, window_params = [{transform_indices = @transform_0, window_bounds = array<i64: 64, 32>}, {pipeline_mode = #tpu.pipeline_mode<synchronous>, transform_indices = @transform_1, window_bounds = array<i64: 32, 768>}, {pipeline_mode = #tpu.pipeline_mode<synchronous>, transform_indices = @transform_2, window_bounds = array<i64: 1, 768>}, {transform_indices = @transform_3, window_bounds = array<i64: 64, 768>}]} {
    %c0 = arith.constant 0 : index
    %c0_0 = arith.constant 0 : index
    %0 = vector.load %arg1[%c0, %c0_0] : memref<64x32xbf16, #tpu.memory_space<vmem>>, vector<64x32xbf16>
    %c0_1 = arith.constant 0 : index
    %c0_2 = arith.constant 0 : index
    %1 = vector.load %arg2[%c0_1, %c0_2] : memref<32x768xbf16, #tpu.memory_space<vmem>>, vector<32x768xbf16>
    %cst = arith.constant dense<0.000000e+00> : vector<64x768xf32>
    %2 = tpu.matmul %0, %1, %cst {dimension_numbers = #tpu.dot_dimension_numbers<[1], [0], [0], [1], [0, 0, 1, 1], [], []>} : vector<64x32xbf16>, vector<32x768xbf16>, vector<64x768xf32> -> vector<64x768xf32>
    %c0_3 = arith.constant 0 : index
    %c0_4 = arith.constant 0 : index
    %3 = vector.load %arg3[%c0_3, %c0_4] : memref<1x768xf32, #tpu.memory_space<vmem>>, vector<1x768xf32>
    %4 = vector.broadcast %3 : vector<1x768xf32> to vector<64x768xf32>
    %5 = arith.addf %2, %4 : vector<64x768xf32>
    %6 = arith.truncf %5 : vector<64x768xf32> to vector<64x768xbf16>
    %c0_5 = arith.constant 0 : index
    %c0_6 = arith.constant 0 : index
    %7 = vector.load %arg4[%c0_5, %c0_6] : memref<64x768xbf16, #tpu.memory_space<vmem>>, vector<64x768xbf16>
    tpu.vector_store %arg4[%c0_5, %c0_6], %6 {strides = array<i32>} : memref<64x768xbf16, #tpu.memory_space<vmem>>, vector<64x768xbf16>,
    return
  }
  func.func @transform_0(%arg0: i32) -> (i32, i32) {
    %c0_i32 = arith.constant 0 : i32
    %c0_i32_0 = arith.constant 0 : i32
    return %arg0, %c0_i32 : i32, i32
  }
  func.func @transform_1(%arg0: i32) -> (i32, i32) {
    %c0_i32 = arith.constant 0 : i32
    %c0_i32_0 = arith.constant 0 : i32
    %c0_i32_1 = arith.constant 0 : i32
    return %c0_i32, %c0_i32_0 : i32, i32
  }
  func.func @transform_2(%arg0: i32) -> (i32, i32) {
    %c0_i32 = arith.constant 0 : i32
    %c0_i32_0 = arith.constant 0 : i32
    %c0_i32_1 = arith.constant 0 : i32
    return %c0_i32, %c0_i32_0 : i32, i32
  }
  func.func @transform_3(%arg0: i32) -> (i32, i32) {
    %c0_i32 = arith.constant 0 : i32
    %c0_i32_0 = arith.constant 0 : i32
    return %arg0, %c0_i32 : i32, i32
  }
}

</mosaic_0001>

<llo_original>
// kernel: tpu_custom_call.1
$region0: #{tpu_custom_call.1}
  #allocation0 [shape = 'u32[]', space=smem, size = 0x4, offset = 0x4, fixed_abs, tag = 'smem constant byte address 0x4 - core index']
  #allocation1 [shape = 'u32[144,128]{1,0:T(1,128)}', space=vmem, size = 0x12000, scoped, tag = 'internal scratch']
  %s0 = inlined_call_operand.vmem [shape: bf16[64,32], index: 0, kind: input, shape index: {}]
  %s1 = inlined_call_operand.hbm [shape: bf16[32,768], index: 1, kind: input, shape index: {}]
  %s2 = inlined_call_operand.vmem [shape: f32[1,768], index: 2, kind: input, shape index: {}]
  %s3 = inlined_call_operand.hbm [shape: bf16[64,768], index: 3, kind: output, shape index: {}]
  %s4 = sld [smem:[#allocation0]]
  $region26: #{tpu_custom_call.1} parent=0
    _
  %s6 = ssub.s32 1, %s4
  %s7 = scalar_select 0, %s6, %s4
  $region1: #{tpu_custom_call.1} parent=0
    #allocation2 [shape = 'u8[49152]{0}', space=vmem, size = 0xc000, scoped, tag = 'input window, operand 1, single buffered']
    #allocation3 [shape = 's32[1]{0}', space=sflag, size = 0x4, scoped, tag = 'scoped memory for tpu_custom_call.1']
    #allocation4 [shape = 's32[1]{0}', space=sflag, size = 0x4, scoped, tag = 'scoped memory for tpu_custom_call.1']
    #allocation5 [shape = 'u8[98304]{0}', space=vmem, size = 0x18000, scoped, tag = 'output window, operand 0, single buffered']
    %8 = vsyncpa [#allocation3], 0
    %9 = vsyncpa [#allocation4], 0
    // Predicated region
    $region2: #{tpu_custom_call.1} parent=1 // pred_check
      _
    $region3: #{tpu_custom_call.1} parent=1 // pred_check_branch
      %11 = sbr.rel (0) target = $region5
    $region4: #{tpu_custom_call.1} parent=1 // pred_region
      _
    $region5: #{tpu_custom_call.1} parent=1 // pred_fallthru
      _
    // Predicated region
    $region6: #{tpu_custom_call.1} parent=1 // pred_check
      _
    $region7: #{tpu_custom_call.1} parent=1 // pred_check_branch
      %13 = sbr.rel (0) target = $region9
    $region8: #{tpu_custom_call.1} parent=1 // pred_region
      %s15 = ssub.s32 1536, 1536
      %16 = vsyncadd [#allocation3], %s15
      %s17 = sshll.u32 [#allocation2], 4
      %s18 = int_to_ptr.vmem [resolvable:$true] %s17
      %23 = dma.hbm_to_vmem [thread:$0]  %s1, 1536, %s18, [#allocation3], 384, 384, 24
    $region9: #{tpu_custom_call.1} parent=1 // pred_fallthru
      _
    // Predicated region
    $region10: #{tpu_custom_call.1} parent=1 // pred_check
      _
    $region11: #{tpu_custom_call.1} parent=1 // pred_check_branch
      %25 = sbr.rel (0) target = $region13
    $region12: #{tpu_custom_call.1} parent=1 // pred_region
      _
    $region13: #{tpu_custom_call.1} parent=1 // pred_fallthru
      _
    // Predicated region
    $region14: #{tpu_custom_call.1} parent=1 // pred_check
      _
    $region15: #{tpu_custom_call.1} parent=1 // pred_check_branch
      %27 = sbr.rel (0) target = $region17
    $region16: #{tpu_custom_call.1} parent=1 // pred_region
      %28 = dma.done [#allocation3], 1536
    $region17: #{tpu_custom_call.1} parent=1 // pred_fallthru
      _
    %v30 = vld [vmem:[%s0] sm:$0xf]
    %v31 = vld [vmem:[%s0 + $0x4] sm:$0xf]
    %v32 = vld [vmem:[%s0 + $0x8] sm:$0xf]
    %v33 = vld [vmem:[%s0 + $0xc] sm:$0xf]
    %v34 = vld [vmem:[%s0 + $0x10] sm:$0xf]
    %v35 = vld [vmem:[%s0 + $0x14] sm:$0xf]
    %v36 = vld [vmem:[%s0 + $0x18] sm:$0xf]
    %v37 = vld [vmem:[%s0 + $0x1c] sm:$0xf]
    %v38 = vld [vmem:[#allocation2] sm:$0xff]
    %v39 = vld [vmem:[#allocation2 + $0x8] sm:$0xff]
    %v40 = vld [vmem:[#allocation2 + $0x10] sm:$0xff]
    %v41 = vld [vmem:[#allocation2 + $0x18] sm:$0xff]
    %v42 = vld [vmem:[#allocation2 + $0x20] sm:$0xff]
    %v43 = vld [vmem:[#allocation2 + $0x28] sm:$0xff]
    %v44 = vld [vmem:[#allocation2 + $0x30] sm:$0xff]
    %v45 = vld [vmem:[#allocation2 + $0x38] sm:$0xff]
    %v46 = vld [vmem:[#allocation2 + $0x40] sm:$0xff]
    %v47 = vld [vmem:[#allocation2 + $0x48] sm:$0xff]
    %v48 = vld [vmem:[#allocation2 + $0x50] sm:$0xff]
    %v49 = vld [vmem:[#allocation2 + $0x58] sm:$0xff]
    %v50 = vld [vmem:[%s2] sm:$0x3f]
    %v52 = vlaneseq
    %v53 = vshrl.u32 %v52, 7
    %v54 = vsub.s32 0, %v53
    %v55 = vrot.slane %v50, %v54
    %v56 = vlaneseq
    %v57 = vshrl.u32 %v56, 7
    %v58 = vsub.s32 1, %v57
    %v59 = vrot.slane %v50, %v58
    %v60 = vlaneseq
    %v61 = vshrl.u32 %v60, 7
    %v62 = vsub.s32 2, %v61
    %v63 = vrot.slane %v50, %v62
    %v64 = vlaneseq
    %v65 = vshrl.u32 %v64, 7
    %v66 = vsub.s32 3, %v65
    %v67 = vrot.slane %v50, %v66
    %v68 = vlaneseq
    %v69 = vshrl.u32 %v68, 7
    %v70 = vsub.s32 4, %v69
    %v71 = vrot.slane %v50, %v70
    %v72 = vlaneseq
    %v73 = vshrl.u32 %v72, 7
    %v74 = vsub.s32 5, %v73
    %v75 = vrot.slane %v50, %v74
    %v90 = vunpack.c.l.b16 %v30
    %v91 = vunpack.c.l.b16 %v31
    %v92 = vunpack.c.l.b16 %v32
    %v93 = vunpack.c.l.b16 %v33
    %v94 = vunpack.c.l.b16 %v34
    %v95 = vunpack.c.l.b16 %v35
    %v96 = vunpack.c.l.b16 %v36
    %v97 = vunpack.c.l.b16 %v37
    %v98 = vpack.c.b16 %v91, %v90
    %v99 = vpack.c.b16 %v93, %v92
    %v100 = vpack.c.b16 %v95, %v94
    %v101 = vpack.c.b16 %v97, %v96
    %v114 = vunpack.c.l.b16 %v38
    %v115 = vunpack.c.h.b16 %v38
    %v116 = vunpack.c.l.b16 %v39
    %v117 = vunpack.c.h.b16 %v39
    %v118 = vunpack.c.l.b16 %v40
    %v119 = vunpack.c.h.b16 %v40
    %v120 = vunpack.c.l.b16 %v41
    %v121 = vunpack.c.h.b16 %v41
    %v122 = vunpack.c.l.b16 %v42
    %v123 = vunpack.c.h.b16 %v42
    %v124 = vunpack.c.l.b16 %v43
    %v125 = vunpack.c.h.b16 %v43
    %v126 = vunpack.c.l.b16 %v44
    %v127 = vunpack.c.h.b16 %v44
    %v128 = vunpack.c.l.b16 %v45
    %v129 = vunpack.c.h.b16 %v45
    %v130 = vunpack.c.l.b16 %v46
    %v131 = vunpack.c.h.b16 %v46
    %v132 = vunpack.c.l.b16 %v47
    %v133 = vunpack.c.h.b16 %v47
    %v134 = vunpack.c.l.b16 %v48
    %v135 = vunpack.c.h.b16 %v48
    %v136 = vunpack.c.l.b16 %v49
    %v137 = vunpack.c.h.b16 %v49
    %v138 = vpack.c.b16 %v120, %v114
    %v139 = vpack.c.b16 %v121, %v115
    %v140 = vpack.c.b16 %v122, %v116
    %v141 = vpack.c.b16 %v123, %v117
    %v142 = vpack.c.b16 %v124, %v118
    %v143 = vpack.c.b16 %v125, %v119
    %v144 = vpack.c.b16 %v132, %v126
    %v145 = vpack.c.b16 %v133, %v127
    %v146 = vpack.c.b16 %v134, %v128
    %v147 = vpack.c.b16 %v135, %v129
    %v148 = vpack.c.b16 %v136, %v130
    %v149 = vpack.c.b16 %v137, %v131
    %vm162 = vcmask 261120
    %v164 = vsel %vm162, %v98, 0
    %v167 = vsel %vm162, %v99, 0
    %v170 = vsel %vm162, %v100, 0
    %v173 = vsel %vm162, %v101, 0
    %175 = vmatprep.subr.bf16.mxu0 %v139
    %176 = vmatpush1.bf16.msra.mxu0 %v138
    %177 = vmatprep.subr.bf16.mxu0 %v145
    %178 = vmatpush1.bf16.msra.mxu0 %v144
    %179 = vmatprep.subr.bf16.mxu0 0
    %180 = vmatpush1.bf16.msra.mxu0 0
    %181 = vmatprep.subr.bf16.mxu0 0
    %182 = vmatpush1.bf16.msra.mxu0 0
    %183 = vmatprep.subr.bf16.mxu0 0
    %184 = vmatpush1.bf16.msra.mxu0 0
    %185 = vmatprep.subr.bf16.mxu0 0
    %186 = vmatpush1.bf16.msra.mxu0 0
    %187 = vmatprep.subr.bf16.mxu0 0
    %188 = vmatpush1.bf16.msra.mxu0 0
    %189 = vmatprep.subr.bf16.mxu0 0
    %190 = vmatpush1.bf16.msra.mxu0 0
    %191 = vmatprep.subr.bf16.mxu0 0
    %192 = vmatpush1.bf16.msra.mxu0 0
    %193 = vmatprep.subr.bf16.mxu0 0
    %194 = vmatpush1.bf16.msra.mxu0 0
    %195 = vmatprep.subr.bf16.mxu0 0
    %196 = vmatpush1.bf16.msra.mxu0 0
    %197 = vmatprep.subr.bf16.mxu0 0
    %198 = vmatpush1.bf16.msra.mxu0 0
    %199 = vmatprep.subr.bf16.mxu0 0
    %200 = vmatpush1.bf16.msra.mxu0 0
    %201 = vmatprep.subr.bf16.mxu0 0
    %202 = vmatpush1.bf16.msra.mxu0 0
    %203 = vmatprep.subr.bf16.mxu0 0
    %204 = vmatpush1.bf16.msra.mxu0 0
    %205 = vmatprep.subr.bf16.mxu0 0
    %206 = vmatpush1.bf16.msra.mxu0 0
    %207 = vmatprep.mubr.bf16.mxu0 0
    %208 = vmatmul.mubr.bf16.gmra.mrb[0].mxu0 %v164
    %v209 = vpop.f32.mrb[0].mxu0
    %v210 = vadd.f32 %v55, %v209
    %v211 = vpop.f32.mrb[0].mxu0
    %v212 = vadd.f32 %v59, %v211
    %v213 = vpop.f32.mrb[0].mxu0
    %v214 = vadd.f32 %v55, %v213
    %v215 = vpop.f32.mrb[0].mxu0
    %v216 = vadd.f32 %v59, %v215
    %217 = vmatprep.mubr.bf16.mxu0 0
    %218 = vmatmul.mubr.bf16.gmra.mrb[0].mxu0 %v167
    %v219 = vpop.f32.mrb[0].mxu0
    %v220 = vadd.f32 %v55, %v219
    %v221 = vpop.f32.mrb[0].mxu0
    %v222 = vadd.f32 %v59, %v221
    %v223 = vpop.f32.mrb[0].mxu0
    %v224 = vadd.f32 %v55, %v223
    %v225 = vpop.f32.mrb[0].mxu0
    %v226 = vadd.f32 %v59, %v225
    %227 = vmatprep.mubr.bf16.mxu0 0
    %228 = vmatmul.mubr.bf16.gmra.mrb[0].mxu0 %v170
    %v229 = vpop.f32.mrb[0].mxu0
    %v230 = vadd.f32 %v55, %v229
    %v231 = vpop.f32.mrb[0].mxu0
    %v232 = vadd.f32 %v59, %v231
    %v233 = vpop.f32.mrb[0].mxu0
    %v234 = vadd.f32 %v55, %v233
    %v235 = vpop.f32.mrb[0].mxu0
    %v236 = vadd.f32 %v59, %v235
    %237 = vmatprep.mubr.bf16.mxu0 0
    %238 = vmatmul.mubr.bf16.gmra.mrb[0].mxu0 %v173
    %v239 = vpop.f32.mrb[0].mxu0
    %v240 = vadd.f32 %v55, %v239
    %v241 = vpop.f32.mrb[0].mxu0
    %v242 = vadd.f32 %v59, %v241
    %v243 = vpop.f32.mrb[0].mxu0
    %v244 = vadd.f32 %v55, %v243
    %v245 = vpop.f32.mrb[0].mxu0
    %v246 = vadd.f32 %v59, %v245
    %247 = vdwg.mxu0
    %248 = vmatprep.subr.bf16.mxu0 %v141
    %249 = vmatpush1.bf16.msra.mxu0 %v140
    %250 = vmatprep.subr.bf16.mxu0 %v147
    %251 = vmatpush1.bf16.msra.mxu0 %v146
    %252 = vmatprep.subr.bf16.mxu0 0
    %253 = vmatpush1.bf16.msra.mxu0 0
    %254 = vmatprep.subr.bf16.mxu0 0
    %255 = vmatpush1.bf16.msra.mxu0 0
    %256 = vmatprep.subr.bf16.mxu0 0
    %257 = vmatpush1.bf16.msra.mxu0 0
    %258 = vmatprep.subr.bf16.mxu0 0
    %259 = vmatpush1.bf16.msra.mxu0 0
    %260 = vmatprep.subr.bf16.mxu0 0
    %261 = vmatpush1.bf16.msra.mxu0 0
    %262 = vmatprep.subr.bf16.mxu0 0
    %263 = vmatpush1.bf16.msra.mxu0 0
    %264 = vmatprep.subr.bf16.mxu0 0
    %265 = vmatpush1.bf16.msra.mxu0 0
    %266 = vmatprep.subr.bf16.mxu0 0
    %267 = vmatpush1.bf16.msra.mxu0 0
    %268 = vmatprep.subr.bf16.mxu0 0
    %269 = vmatpush1.bf16.msra.mxu0 0
    %270 = vmatprep.subr.bf16.mxu0 0
    %271 = vmatpush1.bf16.msra.mxu0 0
    %272 = vmatprep.subr.bf16.mxu0 0
    %273 = vmatpush1.bf16.msra.mxu0 0
    %274 = vmatprep.subr.bf16.mxu0 0
    %275 = vmatpush1.bf16.msra.mxu0 0
    %276 = vmatprep.subr.bf16.mxu0 0
    %277 = vmatpush1.bf16.msra.mxu0 0
    %278 = vmatprep.subr.bf16.mxu0 0
    %279 = vmatpush1.bf16.msra.mxu0 0
    %280 = vmatprep.mubr.bf16.mxu0 0
    %281 = vmatmul.mubr.bf16.gmra.mrb[0].mxu0 %v164
    %v282 = vpop.f32.mrb[0].mxu0
    %v283 = vadd.f32 %v63, %v282
    %v284 = vpop.f32.mrb[0].mxu0
    %v285 = vadd.f32 %v67, %v284
    %v286 = vpop.f32.mrb[0].mxu0
    %v287 = vadd.f32 %v63, %v286
    %v288 = vpop.f32.mrb[0].mxu0
    %v289 = vadd.f32 %v67, %v288
    %290 = vmatprep.mubr.bf16.mxu0 0
    %291 = vmatmul.mubr.bf16.gmra.mrb[0].mxu0 %v167
    %v292 = vpop.f32.mrb[0].mxu0
    %v293 = vadd.f32 %v63, %v292
    %v294 = vpop.f32.mrb[0].mxu0
    %v295 = vadd.f32 %v67, %v294
    %v296 = vpop.f32.mrb[0].mxu0
    %v297 = vadd.f32 %v63, %v296
    %v298 = vpop.f32.mrb[0].mxu0
    %v299 = vadd.f32 %v67, %v298
    %300 = vmatprep.mubr.bf16.mxu0 0
    %301 = vmatmul.mubr.bf16.gmra.mrb[0].mxu0 %v170
    %v302 = vpop.f32.mrb[0].mxu0
    %v303 = vadd.f32 %v63, %v302
    %v304 = vpop.f32.mrb[0].mxu0
    %v305 = vadd.f32 %v67, %v304
    %v306 = vpop.f32.mrb[0].mxu0
    %v307 = vadd.f32 %v63, %v306
    %v308 = vpop.f32.mrb[0].mxu0
    %v309 = vadd.f32 %v67, %v308
    %310 = vmatprep.mubr.bf16.mxu0 0
    %311 = vmatmul.mubr.bf16.gmra.mrb[0].mxu0 %v173
    %v312 = vpop.f32.mrb[0].mxu0
    %v313 = vadd.f32 %v63, %v312
    %v314 = vpop.f32.mrb[0].mxu0
    %v315 = vadd.f32 %v67, %v314
    %v316 = vpop.f32.mrb[0].mxu0
    %v317 = vadd.f32 %v63, %v316
    %v318 = vpop.f32.mrb[0].mxu0
    %v319 = vadd.f32 %v67, %v318
    %320 = vdwg.mxu0
    %321 = vmatprep.subr.bf16.mxu0 %v143
    %322 = vmatpush1.bf16.msra.mxu0 %v142
    %323 = vmatprep.subr.bf16.mxu0 %v149
    %324 = vmatpush1.bf16.msra.mxu0 %v148
    %325 = vmatprep.subr.bf16.mxu0 0
    %326 = vmatpush1.bf16.msra.mxu0 0
    %327 = vmatprep.subr.bf16.mxu0 0
    %328 = vmatpush1.bf16.msra.mxu0 0
    %329 = vmatprep.subr.bf16.mxu0 0
    %330 = vmatpush1.bf16.msra.mxu0 0
    %331 = vmatprep.subr.bf16.mxu0 0
    %332 = vmatpush1.bf16.msra.mxu0 0
    %333 = vmatprep.subr.bf16.mxu0 0
    %334 = vmatpush1.bf16.msra.mxu0 0
    %335 = vmatprep.subr.bf16.mxu0 0
    %336 = vmatpush1.bf16.msra.mxu0 0
    %337 = vmatprep.subr.bf16.mxu0 0
    %338 = vmatpush1.bf16.msra.mxu0 0
    %339 = vmatprep.subr.bf16.mxu0 0
    %340 = vmatpush1.bf16.msra.mxu0 0
    %341 = vmatprep.subr.bf16.mxu0 0
    %342 = vmatpush1.bf16.msra.mxu0 0
    %343 = vmatprep.subr.bf16.mxu0 0
    %344 = vmatpush1.bf16.msra.mxu0 0
    %345 = vmatprep.subr.bf16.mxu0 0
    %346 = vmatpush1.bf16.msra.mxu0 0
    %347 = vmatprep.subr.bf16.mxu0 0
    %348 = vmatpush1.bf16.msra.mxu0 0
    %349 = vmatprep.subr.bf16.mxu0 0
    %350 = vmatpush1.bf16.msra.mxu0 0
    %351 = vmatprep.subr.bf16.mxu0 0
    %352 = vmatpush1.bf16.msra.mxu0 0
    %353 = vmatprep.mubr.bf16.mxu0 0
    %354 = vmatmul.mubr.bf16.gmra.mrb[0].mxu0 %v164
    %v355 = vpop.f32.mrb[0].mxu0
    %v356 = vadd.f32 %v71, %v355
    %v357 = vpop.f32.mrb[0].mxu0
    %v358 = vadd.f32 %v75, %v357
    %v359 = vpop.f32.mrb[0].mxu0
    %v360 = vadd.f32 %v71, %v359
    %v361 = vpop.f32.mrb[0].mxu0
    %v362 = vadd.f32 %v75, %v361
    %363 = vmatprep.mubr.bf16.mxu0 0
    %364 = vmatmul.mubr.bf16.gmra.mrb[0].mxu0 %v167
    %v365 = vpop.f32.mrb[0].mxu0
    %v366 = vadd.f32 %v71, %v365
    %v367 = vpop.f32.mrb[0].mxu0
    %v368 = vadd.f32 %v75, %v367
    %v369 = vpop.f32.mrb[0].mxu0
    %v370 = vadd.f32 %v71, %v369
    %v371 = vpop.f32.mrb[0].mxu0
    %v372 = vadd.f32 %v75, %v371
    %373 = vmatprep.mubr.bf16.mxu0 0
    %374 = vmatmul.mubr.bf16.gmra.mrb[0].mxu0 %v170
    %v375 = vpop.f32.mrb[0].mxu0
    %v376 = vadd.f32 %v71, %v375
    %v377 = vpop.f32.mrb[0].mxu0
    %v378 = vadd.f32 %v75, %v377
    %v379 = vpop.f32.mrb[0].mxu0
    %v380 = vadd.f32 %v71, %v379
    %v381 = vpop.f32.mrb[0].mxu0
    %v382 = vadd.f32 %v75, %v381
    %383 = vmatprep.mubr.bf16.mxu0 0
    %384 = vmatmul.mubr.bf16.gmra.mrb[0].mxu0 %v173
    %v385 = vpop.f32.mrb[0].mxu0
    %v386 = vadd.f32 %v71, %v385
    %v387 = vpop.f32.mrb[0].mxu0
    %v388 = vadd.f32 %v75, %v387
    %v389 = vpop.f32.mrb[0].mxu0
    %v390 = vadd.f32 %v71, %v389
    %v391 = vpop.f32.mrb[0].mxu0
    %v392 = vadd.f32 %v75, %v391
    %393 = vdwg.mxu0
    %v394 = vpack.c.bf16 %v214, %v210
    %v395 = vpack.c.bf16 %v216, %v212
    %v396 = vpack.c.bf16 %v287, %v283
    %v397 = vpack.c.bf16 %v289, %v285
    %v398 = vpack.c.bf16 %v360, %v356
    %v399 = vpack.c.bf16 %v362, %v358
    %v400 = vpack.c.bf16 %v224, %v220
    %v401 = vpack.c.bf16 %v226, %v222
    %v402 = vpack.c.bf16 %v297, %v293
    %v403 = vpack.c.bf16 %v299, %v295
    %v404 = vpack.c.bf16 %v370, %v366
    %v405 = vpack.c.bf16 %v372, %v368
    %v406 = vpack.c.bf16 %v234, %v230
    %v407 = vpack.c.bf16 %v236, %v232
    %v408 = vpack.c.bf16 %v307, %v303
    %v409 = vpack.c.bf16 %v309, %v305
    %v410 = vpack.c.bf16 %v380, %v376
    %v411 = vpack.c.bf16 %v382, %v378
    %v412 = vpack.c.bf16 %v244, %v240
    %v413 = vpack.c.bf16 %v246, %v242
    %v414 = vpack.c.bf16 %v317, %v313
    %v415 = vpack.c.bf16 %v319, %v315
    %v416 = vpack.c.bf16 %v390, %v386
    %v417 = vpack.c.bf16 %v392, %v388
    %v442 = vunpack.c.l.b16 %v394
    %v443 = vunpack.c.l.b16 %v395
    %v444 = vunpack.c.l.b16 %v396
    %v445 = vunpack.c.l.b16 %v397
    %v446 = vunpack.c.l.b16 %v398
    %v447 = vunpack.c.l.b16 %v399
    %v448 = vunpack.c.h.b16 %v394
    %v449 = vunpack.c.h.b16 %v395
    %v450 = vunpack.c.h.b16 %v396
    %v451 = vunpack.c.h.b16 %v397
    %v452 = vunpack.c.h.b16 %v398
    %v453 = vunpack.c.h.b16 %v399
    %v454 = vunpack.c.l.b16 %v400
    %v455 = vunpack.c.l.b16 %v401
    %v456 = vunpack.c.l.b16 %v402
    %v457 = vunpack.c.l.b16 %v403
    %v458 = vunpack.c.l.b16 %v404
    %v459 = vunpack.c.l.b16 %v405
    %v460 = vunpack.c.h.b16 %v400
    %v461 = vunpack.c.h.b16 %v401
    %v462 = vunpack.c.h.b16 %v402
    %v463 = vunpack.c.h.b16 %v403
    %v464 = vunpack.c.h.b16 %v404
    %v465 = vunpack.c.h.b16 %v405
    %v466 = vunpack.c.l.b16 %v406
    %v467 = vunpack.c.l.b16 %v407
    %v468 = vunpack.c.l.b16 %v408
    %v469 = vunpack.c.l.b16 %v409
    %v470 = vunpack.c.l.b16 %v410
    %v471 = vunpack.c.l.b16 %v411
    %v472 = vunpack.c.h.b16 %v406
    %v473 = vunpack.c.h.b16 %v407
    %v474 = vunpack.c.h.b16 %v408
    %v475 = vunpack.c.h.b16 %v409
    %v476 = vunpack.c.h.b16 %v410
    %v477 = vunpack.c.h.b16 %v411
    %v478 = vunpack.c.l.b16 %v412
    %v479 = vunpack.c.l.b16 %v413
    %v480 = vunpack.c.l.b16 %v414
    %v481 = vunpack.c.l.b16 %v415
    %v482 = vunpack.c.l.b16 %v416
    %v483 = vunpack.c.l.b16 %v417
    %v484 = vunpack.c.h.b16 %v412
    %v485 = vunpack.c.h.b16 %v413
    %v486 = vunpack.c.h.b16 %v414
    %v487 = vunpack.c.h.b16 %v415
    %v488 = vunpack.c.h.b16 %v416
    %v489 = vunpack.c.h.b16 %v417
    %v490 = vpack.c.b16 %v443, %v442
    %v491 = vpack.c.b16 %v445, %v444
    %v492 = vpack.c.b16 %v447, %v446
    %v493 = vpack.c.b16 %v449, %v448
    %v494 = vpack.c.b16 %v451, %v450
    %v495 = vpack.c.b16 %v453, %v452
    %v496 = vpack.c.b16 %v455, %v454
    %v497 = vpack.c.b16 %v457, %v456
    %v498 = vpack.c.b16 %v459, %v458
    %v499 = vpack.c.b16 %v461, %v460
    %v500 = vpack.c.b16 %v463, %v462
    %v501 = vpack.c.b16 %v465, %v464
    %v502 = vpack.c.b16 %v467, %v466
    %v503 = vpack.c.b16 %v469, %v468
    %v504 = vpack.c.b16 %v471, %v470
    %v505 = vpack.c.b16 %v473, %v472
    %v506 = vpack.c.b16 %v475, %v474
    %v507 = vpack.c.b16 %v477, %v476
    %v508 = vpack.c.b16 %v479, %v478
    %v509 = vpack.c.b16 %v481, %v480
    %v510 = vpack.c.b16 %v483, %v482
    %v511 = vpack.c.b16 %v485, %v484
    %v512 = vpack.c.b16 %v487, %v486
    %v513 = vpack.c.b16 %v489, %v488
    %538 = vst [vmem:[#allocation5] sm:$0xff] %v490
    %539 = vst [vmem:[#allocation5 + $0x8] sm:$0xff] %v491
    %540 = vst [vmem:[#allocation5 + $0x10] sm:$0xff] %v492
    %541 = vst [vmem:[#allocation5 + $0x18] sm:$0xff] %v493
    %542 = vst [vmem:[#allocation5 + $0x20] sm:$0xff] %v494
    %543 = vst [vmem:[#allocation5 + $0x28] sm:$0xff] %v495
    %544 = vst [vmem:[#allocation5 + $0x30] sm:$0xff] %v496
    %545 = vst [vmem:[#allocation5 + $0x38] sm:$0xff] %v497
    %546 = vst [vmem:[#allocation5 + $0x40] sm:$0xff] %v498
    %547 = vst [vmem:[#allocation5 + $0x48] sm:$0xff] %v499
    %548 = vst [vmem:[#allocation5 + $0x50] sm:$0xff] %v500
    %549 = vst [vmem:[#allocation5 + $0x58] sm:$0xff] %v501
    %550 = vst [vmem:[#allocation5 + $0x60] sm:$0xff] %v502
    %551 = vst [vmem:[#allocation5 + $0x68] sm:$0xff] %v503
    %552 = vst [vmem:[#allocation5 + $0x70] sm:$0xff] %v504
    %553 = vst [vmem:[#allocation5 + $0x78] sm:$0xff] %v505
    %554 = vst [vmem:[#allocation5 + $0x80] sm:$0xff] %v506
    %555 = vst [vmem:[#allocation5 + $0x88] sm:$0xff] %v507
    %556 = vst [vmem:[#allocation5 + $0x90] sm:$0xff] %v508
    %557 = vst [vmem:[#allocation5 + $0x98] sm:$0xff] %v509
    %558 = vst [vmem:[#allocation5 + $0xa0] sm:$0xff] %v510
    %559 = vst [vmem:[#allocation5 + $0xa8] sm:$0xff] %v511
    %560 = vst [vmem:[#allocation5 + $0xb0] sm:$0xff] %v512
    %561 = vst [vmem:[#allocation5 + $0xb8] sm:$0xff] %v513
    // Predicated region
    $region18: #{tpu_custom_call.1} parent=1 // pred_check
      _
    $region19: #{tpu_custom_call.1} parent=1 // pred_check_branch
      %563 = sbr.rel (0) target = $region21
    $region20: #{tpu_custom_call.1} parent=1 // pred_region
      %s565 = ssub.s32 3072, 3072
      %566 = vsyncadd [#allocation4], %s565
      %s567 = sshll.u32 [#allocation5], 4
      %s568 = int_to_ptr.vmem [resolvable:$true] %s567
      %573 = dma.vmem_to_hbm [thread:$0]  %s568, 3072, %s3, [#allocation4], 384, 384, 24
    $region21: #{tpu_custom_call.1} parent=1 // pred_fallthru
      _
    // Predicated region
    $region22: #{tpu_custom_call.1} parent=1 // pred_check
      _
    $region23: #{tpu_custom_call.1} parent=1 // pred_check_branch
      %575 = sbr.rel (0) target = $region25
    $region24: #{tpu_custom_call.1} parent=1 // pred_region
      %576 = dma.done [#allocation4], 3072
    $region25: #{tpu_custom_call.1} parent=1 // pred_fallthru
      _
    %577 = vsyncpa [#allocation3], 1
    %578 = vsyncpa [#allocation4], 1

</llo_original>
